<compile_context>
chip_gen: v5e
topology: v5e:2x2
jax: 0.10.0
libtpu: 0.0.40
codegen_flags: <defaults>
</compile_context>

<pallas_src>
import jax
import jax.numpy as jnp
from jax.experimental import pallas as pl
from jax.experimental.pallas import tpu as pltpu


def _term_attention_kernel(x_ref, w1_ref, b1_ref, w2_ref, o_ref):
    # x_ref:  (TB, S, H)  slab of batch rows, in the caller's dtype
    # w1_ref: (H, 64)     Linear1 weight with termWeight pre-folded (x's dtype)
    # b1_ref: (1, 64)     Linear1 bias (f32)
    # w2_ref: (1, 64)     Linear2 weight laid out as a lane vector (f32)
    # o_ref:  (TB, H)
    tb, s, h = x_ref.shape
    x = x_ref[...]

    # Linear(H, 64) + ReLU over all TB*S rows as one 2-D MXU matmul with f32
    # accumulation.  Collapsing (TB, S) is layout-preserving when S % 8 == 0;
    # for other S Mosaic inserts a small in-VMEM relayout (kept in favour of a
    # rank-3 dot_general, whose Mosaic lowering support is not guaranteed).
    xf = x.reshape(tb * s, h)
    h1 = jnp.dot(xf, w1_ref[...], preferred_element_type=jnp.float32)
    h1 = jnp.maximum(h1 + b1_ref[...], 0.0)                      # (TB*S, 64)

    # Linear(64, 1) as a VPU multiply + lane reduce.  b2 is omitted: adding a
    # constant to every logit leaves the softmax unchanged (exact algebra).
    score = jnp.sum(h1 * w2_ref[...], axis=-1, keepdims=True)    # (TB*S, 1)
    score = score.reshape(tb, s, 1)

    # Row-wise softmax over the sequence axis (exact division; kernel is
    # HBM-bound so the EUP approximation would buy no wall time).
    m = jnp.max(score, axis=1, keepdims=True)                    # (TB, 1, 1)
    e = jnp.exp(score - m)                                       # (TB, S, 1)
    p = e / jnp.sum(e, axis=1, keepdims=True)

    # Probability-weighted sum over S with f32 accumulation -> (TB, H).
    acc = jnp.sum(x.astype(jnp.float32) * p, axis=1)
    o_ref[...] = acc.astype(o_ref.dtype)


def _tpu_topology():
    """(tensorcores_per_device, physical_vmem_bytes) — perf hints only."""
    cores, vmem = 1, 64 * 1024 * 1024
    try:
        info = pltpu.get_tpu_info()
        v = getattr(info, "vmem_capacity_bytes", None)
        if isinstance(v, int) and v > 0:
            vmem = v
        for attr in ("num_cores", "num_tensorcores", "tensorcore_count",
                     "core_count"):
            c = getattr(info, attr, None)
            if isinstance(c, int) and c > 0:
                cores = c
                break
    except Exception:
        pass
    if cores == 1:
        try:
            kind = jax.devices()[0].device_kind.lower()
            if any(t in kind for t in ("v7", "v4", "v5p")):
                cores = 2
        except Exception:
            pass
    return cores, vmem


def term_attention(hidden_states, term_weight, w1, b1, w2, b2,
                   *, target_block_bytes=None):
    """hidden_states: (B, S, H) float -> (B, H) in the input dtype.

    B == 0 -> zeros(H); S == 0 -> zeros((B, H))  (torch empty-input path).
    """
    B, S, H = hidden_states.shape
    if B == 0:
        return jnp.zeros((H,), dtype=jnp.float32)        # torch: zeros(hiddenDim)
    if S == 0:
        return jnp.zeros((B, H), dtype=hidden_states.dtype)

    if not jnp.issubdtype(hidden_states.dtype, jnp.floating):
        hidden_states = hidden_states.astype(jnp.float32)
    dtype = hidden_states.dtype
    itemsize = jnp.dtype(dtype).itemsize

    # Fold termWeight into the first Linear: (x * w) @ W1 == x @ (W1 * w[:, None]).
    w1f = (w1.astype(jnp.float32) * term_weight.astype(jnp.float32)[:, None])
    w1f = w1f.astype(dtype)                                       # match MXU operand dtype
    b1r = b1.reshape(1, 64).astype(jnp.float32)
    w2r = w2.reshape(1, 64).astype(jnp.float32)                   # (64, 1) -> lane row
    del b2  # constant logit shift: a softmax no-op

    cores, phys_vmem = _tpu_topology()
    if target_block_bytes is None:
        # Bigger blocks on 128 MiB-VMEM chips (v5e/v6e); slightly smaller on
        # v7x where physical VMEM is 64 MiB but HBM is ~3.2 TB/s.
        target_block_bytes = (8 << 20) if phys_vmem >= (96 << 20) else (6 << 20)

    # Per-batch-row VMEM footprint: double-buffered input + output blocks,
    # f32 intermediates (h1, the p-weighted f32 temp, softmax scalars).
    bytes_per_row = (2 * S * H * itemsize
                     + 2 * H * itemsize
                     + S * 64 * 4
                     + S * H * 4
                     + S * 64)
    fixed_bytes = 2 * (H * 64 * itemsize + 2 * 64 * 4) + (2 << 20)
    vmem_budget = (phys_vmem * 7) // 10
    tb_vmem_cap = max(1, (vmem_budget - fixed_bytes) // bytes_per_row)

    # Rows per grid step: aim for multi-MiB streamed blocks (per-step overhead
    # ~0.35 us otherwise dominates), cap by the VMEM budget, and only force
    # >= `cores` grid steps on multi-TensorCore chips.
    row_stream_bytes = S * H * itemsize
    tb = max(1, target_block_bytes // row_stream_bytes)
    tb = min(tb, tb_vmem_cap)
    if cores > 1 and B > 1:
        tb = min(tb, pl.cdiv(B, cores))
    if tb >= B:
        tb = B                       # single block covers the whole batch
    elif tb >= 8:
        tb = (tb // 8) * 8           # sublane-aligned output stores
    grid_b = pl.cdiv(B, tb)

    vmem_limit = int(min(phys_vmem,
                         max(32 << 20,
                             fixed_bytes + tb * bytes_per_row + (4 << 20))))

    # No wrapper-side padding: when tb does not divide B the last grid step is
    # a partial block.  Pallas masks the out-of-range output writes, and the
    # unspecified data read into the tail's padded rows only ever feeds those
    # rows' (discarded) results — every batch row is computed independently.
    out = pl.pallas_call(
        _term_attention_kernel,
        out_shape=jax.ShapeDtypeStruct((B, H), dtype),
        grid=(grid_b,),
        in_specs=[
            pl.BlockSpec((tb, S, H), lambda b: (b, 0, 0)),   # hidden_states slab
            pl.BlockSpec((H, 64), lambda b: (0, 0)),         # folded Linear1 weight
            pl.BlockSpec((1, 64), lambda b: (0, 0)),         # Linear1 bias
            pl.BlockSpec((1, 64), lambda b: (0, 0)),         # Linear2 weight row
        ],
        out_specs=pl.BlockSpec((tb, H), lambda b: (b, 0)),
        compiler_params=pltpu.CompilerParams(
            dimension_semantics=("parallel",),
            vmem_limit_bytes=vmem_limit,
        ),
    )(hidden_states, w1f, b1r, w2r)

    return out


def _reference(hidden_states, term_weight, w1, b1, w2, b2):
    ah = hidden_states * term_weight                             # (B, S, H)
    h1 = jnp.maximum(ah @ w1 + b1, 0.0)                          # (B, S, 64)
    score = h1 @ w2 + b2                                         # (B, S, 1)
    p = jax.nn.softmax(score, axis=1)
    return jnp.sum(hidden_states * p, axis=1)                    # (B, H)


if __name__ == "__main__":
    key = jax.random.PRNGKey(0)
    k_x, k_w, k_w1, k_b1, k_w2, k_b2, k_x2, k_x3, k_x4 = jax.random.split(key, 9)

    S, H = 8, 32
    # Synthetic parameters (shapes from __init__):
    #   termWeight: (H,); Linear(H,64): W1 (H,64), b1 (64,); Linear(64,1): W2 (64,1), b2 (1,)
    term_weight = jax.random.normal(k_w, (H,), dtype=jnp.float32)
    w1 = jax.random.normal(k_w1, (H, 64), dtype=jnp.float32) * 0.1
    b1 = jax.random.normal(k_b1, (64,), dtype=jnp.float32) * 0.1
    w2 = jax.random.normal(k_w2, (64, 1), dtype=jnp.float32) * 0.1
    b2 = jax.random.normal(k_b2, (1,), dtype=jnp.float32) * 0.1

    # (key, B, forced target_block_bytes): default single-block case, an
    # 8-aligned multi-block case, and a ragged tail-block case (no wrapper pad).
    cases = [
        (k_x, 2, None),
        (k_x2, 16, 8 * 1024),    # tb = 8  -> two aligned blocks
        (k_x3, 5, 2 * 1024),     # tb = 2  -> partial last block over B = 5
    ]
    for kx, B, blk in cases:
        x = jax.random.normal(kx, (B, S, H), dtype=jnp.float32)
        kwargs = {} if blk is None else {"target_block_bytes": blk}
        out = jax.block_until_ready(
            term_attention(x, term_weight, w1, b1, w2, b2, **kwargs))
        ref = _reference(x, term_weight, w1, b1, w2, b2)
        assert out.shape == (B, H)
        assert jnp.allclose(out, ref, atol=1e-3, rtol=1e-3), f"mismatch at B={B}"

    # bf16 streaming path (no wrapper upcast copy): compare to the f32
    # reference with bf16-appropriate tolerance.
    xb = jax.random.normal(k_x4, (4, S, H), dtype=jnp.float32)
    out_bf = jax.block_until_ready(
        term_attention(xb.astype(jnp.bfloat16), term_weight, w1, b1, w2, b2))
    ref_bf = _reference(xb, term_weight, w1, b1, w2, b2)
    assert out_bf.dtype == jnp.bfloat16
    assert jnp.allclose(out_bf.astype(jnp.float32), ref_bf, atol=3e-2, rtol=3e-2), \
        "mismatch on bf16 path"

    print("KERNEL_OK")
</pallas_src>

<mosaic_0001>
module attributes {stable_mosaic.version = 11 : i64} {
  func.func @_term_attention_kernel(%arg0: i32, %arg1: memref<2x8x32xf32, #tpu.memory_space<vmem>>, %arg2: memref<32x64xf32, #tpu.memory_space<vmem>>, %arg3: memref<1x64xf32, #tpu.memory_space<vmem>>, %arg4: memref<1x64xf32, #tpu.memory_space<vmem>>, %arg5: memref<2x32xf32, #tpu.memory_space<vmem>>) attributes {dimension_semantics = [#tpu.dimension_semantics<parallel>], iteration_bounds = array<i64: 1>, scalar_prefetch = 0 : i64, scratch_operands = 0 : i64, tpu.core_type = #tpu.core_type<tc>, window_params = [{transform_indices = @transform_0, window_bounds = array<i64: 2, 8, 32>}, {pipeline_mode = #tpu.pipeline_mode<synchronous>, transform_indices = @transform_1, window_bounds = array<i64: 32, 64>}, {pipeline_mode = #tpu.pipeline_mode<synchronous>, transform_indices = @transform_2, window_bounds = array<i64: 1, 64>}, {pipeline_mode = #tpu.pipeline_mode<synchronous>, transform_indices = @transform_3, window_bounds = array<i64: 1, 64>}, {transform_indices = @transform_4, window_bounds = array<i64: 2, 32>}]} {
    %c0 = arith.constant 0 : index
    %c0_0 = arith.constant 0 : index
    %c0_1 = arith.constant 0 : index
    %0 = vector.load %arg1[%c0, %c0_0, %c0_1] : memref<2x8x32xf32, #tpu.memory_space<vmem>>, vector<2x8x32xf32>
    %1 = vector.shape_cast %0 : vector<2x8x32xf32> to vector<16x32xf32>
    %c0_2 = arith.constant 0 : index
    %c0_3 = arith.constant 0 : index
    %2 = vector.load %arg2[%c0_2, %c0_3] : memref<32x64xf32, #tpu.memory_space<vmem>>, vector<32x64xf32>
    %cst = arith.constant dense<0.000000e+00> : vector<16x64xf32>
    %3 = tpu.matmul %1, %2, %cst {dimension_numbers = #tpu.dot_dimension_numbers<[1], [0], [0], [1], [0, 0, 1, 1], [], []>} : vector<16x32xf32>, vector<32x64xf32>, vector<16x64xf32> -> vector<16x64xf32>
    %c0_4 = arith.constant 0 : index
    %c0_5 = arith.constant 0 : index
    %4 = vector.load %arg3[%c0_4, %c0_5] : memref<1x64xf32, #tpu.memory_space<vmem>>, vector<1x64xf32>
    %5 = vector.broadcast %4 : vector<1x64xf32> to vector<16x64xf32>
    %6 = arith.addf %3, %5 : vector<16x64xf32>
    %cst_6 = arith.constant 0.000000e+00 : f32
    %7 = vector.broadcast %cst_6 : f32 to vector<16x64xf32>
    %8 = arith.maximumf %6, %7 : vector<16x64xf32>
    %c0_7 = arith.constant 0 : index
    %c0_8 = arith.constant 0 : index
    %9 = vector.load %arg4[%c0_7, %c0_8] : memref<1x64xf32, #tpu.memory_space<vmem>>, vector<1x64xf32>
    %10 = vector.broadcast %9 : vector<1x64xf32> to vector<16x64xf32>
    %11 = arith.mulf %8, %10 : vector<16x64xf32>
    %cst_9 = arith.constant dense<0.000000e+00> : vector<16xf32>
    %12 = vector.multi_reduction <add>, %11, %cst_9 [1] : vector<16x64xf32> to vector<16xf32>
    %13 = vector.shape_cast %12 : vector<16xf32> to vector<16x1xf32>
    %14 = vector.shape_cast %13 : vector<16x1xf32> to vector<2x8x1xf32>
    %cst_10 = arith.constant dense<0xFF800000> : vector<2x1xf32>
    %15 = vector.multi_reduction <maximumf>, %14, %cst_10 [1] : vector<2x8x1xf32> to vector<2x1xf32>
    %16 = vector.shape_cast %15 : vector<2x1xf32> to vector<2x1x1xf32>
    %17 = vector.broadcast %16 : vector<2x1x1xf32> to vector<2x8x1xf32>
    %18 = arith.subf %14, %17 : vector<2x8x1xf32>
    %19 = math.exp %18 : vector<2x8x1xf32>
    %cst_11 = arith.constant dense<0.000000e+00> : vector<2x1xf32>
    %20 = vector.multi_reduction <add>, %19, %cst_11 [1] : vector<2x8x1xf32> to vector<2x1xf32>
    %21 = vector.shape_cast %20 : vector<2x1xf32> to vector<2x1x1xf32>
    %22 = vector.broadcast %21 : vector<2x1x1xf32> to vector<2x8x1xf32>
    %23 = arith.divf %19, %22 : vector<2x8x1xf32>
    %24 = vector.broadcast %23 : vector<2x8x1xf32> to vector<2x8x32xf32>
    %25 = arith.mulf %0, %24 : vector<2x8x32xf32>
    %cst_12 = arith.constant dense<0.000000e+00> : vector<2x32xf32>
    %26 = vector.multi_reduction <add>, %25, %cst_12 [1] : vector<2x8x32xf32> to vector<2x32xf32>
    %c0_13 = arith.constant 0 : index
    %c0_14 = arith.constant 0 : index
    %27 = vector.load %arg5[%c0_13, %c0_14] : memref<2x32xf32, #tpu.memory_space<vmem>>, vector<2x32xf32>
    tpu.vector_store %arg5[%c0_13, %c0_14], %26 {strides = array<i32>} : memref<2x32xf32, #tpu.memory_space<vmem>>, vector<2x32xf32>,
    return
  }
  func.func @transform_0(%arg0: i32) -> (i32, i32, i32) {
    %c0_i32 = arith.constant 0 : i32
    %c0_i32_0 = arith.constant 0 : i32
    %c0_i32_1 = arith.constant 0 : i32
    return %arg0, %c0_i32, %c0_i32_0 : i32, i32, i32
  }
  func.func @transform_1(%arg0: i32) -> (i32, i32) {
    %c0_i32 = arith.constant 0 : i32
    %c0_i32_0 = arith.constant 0 : i32
    %c0_i32_1 = arith.constant 0 : i32
    return %c0_i32, %c0_i32_0 : i32, i32
  }
  func.func @transform_2(%arg0: i32) -> (i32, i32) {
    %c0_i32 = arith.constant 0 : i32
    %c0_i32_0 = arith.constant 0 : i32
    %c0_i32_1 = arith.constant 0 : i32
    return %c0_i32, %c0_i32_0 : i32, i32
  }
  func.func @transform_3(%arg0: i32) -> (i32, i32) {
    %c0_i32 = arith.constant 0 : i32
    %c0_i32_0 = arith.constant 0 : i32
    %c0_i32_1 = arith.constant 0 : i32
    return %c0_i32, %c0_i32_0 : i32, i32
  }
  func.func @transform_4(%arg0: i32) -> (i32, i32) {
    %c0_i32 = arith.constant 0 : i32
    %c0_i32_0 = arith.constant 0 : i32
    return %arg0, %c0_i32 : i32, i32
  }
}

</mosaic_0001>

<llo_original>
// kernel: tpu_custom_call.1
$region0: #{tpu_custom_call.1}
  #allocation0 [shape = 'u32[]', space=smem, size = 0x4, offset = 0x4, fixed_abs, tag = 'smem constant byte address 0x4 - core index']
  #allocation1 [shape = 'u32[72,128]{1,0:T(1,128)}', space=vmem, size = 0x9000, scoped, tag = 'internal scratch']
  %s0 = inlined_call_operand.hbm [shape: f32[2,8,32], index: 0, kind: input, shape index: {}]
  %s1 = inlined_call_operand.hbm [shape: f32[32,64], index: 1, kind: input, shape index: {}]
  %s2 = inlined_call_operand.vmem [shape: f32[1,64], index: 2, kind: input, shape index: {}]
  %s3 = inlined_call_operand.vmem [shape: f32[1,64], index: 3, kind: input, shape index: {}]
  %s4 = inlined_call_operand.hbm [shape: f32[2,32], index: 4, kind: output, shape index: {}]
  %s5 = sld [smem:[#allocation0]]
  $region34: #{tpu_custom_call.1} parent=0
    _
  %s7 = ssub.s32 1, %s5
  %s8 = scalar_select 0, %s7, %s5
  $region1: #{tpu_custom_call.1} parent=0
    #allocation2 [shape = 'u8[8192]{0}', space=vmem, size = 0x2000, scoped, tag = 'input window, operand 0, single buffered']
    #allocation3 [shape = 's32[1]{0}', space=sflag, size = 0x4, scoped, tag = 'scoped memory for tpu_custom_call.1']
    #allocation4 [shape = 's32[1]{0}', space=sflag, size = 0x4, scoped, tag = 'scoped memory for tpu_custom_call.1']
    #allocation5 [shape = 'u8[16384]{0}', space=vmem, size = 0x4000, scoped, tag = 'input window, operand 1, single buffered']
    #allocation6 [shape = 's32[1]{0}', space=sflag, size = 0x4, scoped, tag = 'scoped memory for tpu_custom_call.1']
    #allocation7 [shape = 'u8[1024]{0}', space=vmem, size = 0x400, scoped, tag = 'output window, operand 0, single buffered']
    %9 = vsyncpa [#allocation3], 0
    %10 = vsyncpa [#allocation6], 0
    %11 = vsyncpa [#allocation4], 0
    // Predicated region
    $region2: #{tpu_custom_call.1} parent=1 // pred_check
      _
    $region3: #{tpu_custom_call.1} parent=1 // pred_check_branch
      %13 = sbr.rel (0) target = $region5
    $region4: #{tpu_custom_call.1} parent=1 // pred_region
      %15 = vsyncadd [#allocation3], 0
      %s16 = sshll.u32 %s0, 4
      %s17 = int_to_ptr.hbm [resolvable:$true] %s16
      %s18 = sshll.u32 [#allocation2], 4
      %s19 = int_to_ptr.vmem [resolvable:$true] %s18
      %24 = dma.hbm_to_vmem [thread:$0]  %s17, 256, %s19, [#allocation3], 128, 128, 8
    $region5: #{tpu_custom_call.1} parent=1 // pred_fallthru
      _
    // Predicated region
    $region6: #{tpu_custom_call.1} parent=1 // pred_check
      _
    $region7: #{tpu_custom_call.1} parent=1 // pred_check_branch
      %26 = sbr.rel (0) target = $region9
    $region8: #{tpu_custom_call.1} parent=1 // pred_region
      %28 = vsyncadd [#allocation6], 0
      %s29 = sshll.u32 %s1, 4
      %s30 = int_to_ptr.hbm [resolvable:$true] %s29
      %s31 = sshll.u32 [#allocation5], 4
      %s32 = int_to_ptr.vmem [resolvable:$true] %s31
      %37 = dma.hbm_to_vmem [thread:$0]  %s30, 512, %s32, [#allocation6], 128, 128, 8
    $region9: #{tpu_custom_call.1} parent=1 // pred_fallthru
      _
    // Predicated region
    $region10: #{tpu_custom_call.1} parent=1 // pred_check
      _
    $region11: #{tpu_custom_call.1} parent=1 // pred_check_branch
      %39 = sbr.rel (0) target = $region13
    $region12: #{tpu_custom_call.1} parent=1 // pred_region
      _
    $region13: #{tpu_custom_call.1} parent=1 // pred_fallthru
      _
    // Predicated region
    $region14: #{tpu_custom_call.1} parent=1 // pred_check
      _
    $region15: #{tpu_custom_call.1} parent=1 // pred_check_branch
      %41 = sbr.rel (0) target = $region17
    $region16: #{tpu_custom_call.1} parent=1 // pred_region
      _
    $region17: #{tpu_custom_call.1} parent=1 // pred_fallthru
      _
    // Predicated region
    $region18: #{tpu_custom_call.1} parent=1 // pred_check
      _
    $region19: #{tpu_custom_call.1} parent=1 // pred_check_branch
      %43 = sbr.rel (0) target = $region21
    $region20: #{tpu_custom_call.1} parent=1 // pred_region
      %45 = dma.done [#allocation3], 256
    $region21: #{tpu_custom_call.1} parent=1 // pred_fallthru
      _
    // Predicated region
    $region22: #{tpu_custom_call.1} parent=1 // pred_check
      _
    $region23: #{tpu_custom_call.1} parent=1 // pred_check_branch
      %47 = sbr.rel (0) target = $region25
    $region24: #{tpu_custom_call.1} parent=1 // pred_region
      %49 = dma.done [#allocation6], 512
    $region25: #{tpu_custom_call.1} parent=1 // pred_fallthru
      _
    %v50 = vld [vmem:[#allocation2] sm:$0xff]
    %v51 = vld [vmem:[#allocation2 + $0x8] sm:$0xff]
    %v52 = vld [vmem:[#allocation5] sm:$0xff]
    %v53 = vld [vmem:[#allocation5 + $0x8] sm:$0xff]
    %v54 = vld [vmem:[#allocation5 + $0x10] sm:$0xff]
    %v55 = vld [vmem:[#allocation5 + $0x18] sm:$0xff]
    %v56 = vld [vmem:[%s2] sm:$0x1]
    %v58 = vperm.slane %v56, 0
    %vm60 = vcmask 261120
    %v62 = vsel %vm60, %v50, 0
    %v65 = vsel %vm60, %v51, 0
    %67 = vmatpush.msra.mxu0 0.0
    %68 = vmatpush.msra.mxu0 0.0
    %69 = vmatpush.msra.mxu0 0.0
    %70 = vmatpush.msra.mxu0 0.0
    %71 = vmatpush.msra.mxu0 0.0
    %72 = vmatpush.msra.mxu0 0.0
    %73 = vmatpush.msra.mxu0 0.0
    %74 = vmatpush.msra.mxu0 0.0
    %75 = vmatpush.msra.mxu0 0.0
    %76 = vmatpush.msra.mxu0 0.0
    %77 = vmatpush.msra.mxu0 0.0
    %78 = vmatpush.msra.mxu0 0.0
    %79 = vmatpush.msra.mxu0 %v55
    %80 = vmatpush.msra.mxu0 %v54
    %81 = vmatpush.msra.mxu0 %v53
    %82 = vmatpush.msra.mxu0 %v52
    %83 = vmatmul.f32.gmra.mxu0 %v62
    %v84 = vpop.f32.mrf.mxu0
    %v85 = vadd.f32 %v58, %v84
    %86 = vmatmul.f32.gmra.mxu0 %v65
    %v87 = vpop.f32.mrf.mxu0
    %v88 = vadd.f32 %v58, %v87
    %89 = vdwg.mxu0
    %v90 = vmax.f32 %v85, 0.0
    %v91 = vmax.f32 %v88, 0.0
    %v92 = vld [vmem:[%s3] sm:$0x1]
    %v94 = vperm.slane %v92, 0
    %v96 = vmul.f32 %v90, %v94
    %v97 = vmul.f32 %v91, %v94
    %vm98 = vcmask 523264
    %v99 = vsel %vm98, %v96, 0.0
    %100 = vadd.xlane.f32.xlu0 %v99
    %v101 = vpop.xlane.xlu0 %100
    %v102 = vsel %vm98, %v97, 0.0
    %103 = vadd.xlane.f32.xlu0 %v102
    %v104 = vpop.xlane.xlu0 %103
    %v105 = vrot.slane %v101, 4
    %v106 = vmax.f32 %v101, %v105
    %v107 = vrot.slane %v106, 2
    %v108 = vmax.f32 %v106, %v107
    %v109 = vrot.slane %v108, 1
    %v110 = vmax.f32 %v108, %v109
    %v111 = vrot.slane %v104, 4
    %v112 = vmax.f32 %v104, %v111
    %v113 = vrot.slane %v112, 2
    %v114 = vmax.f32 %v112, %v113
    %v115 = vrot.slane %v114, 1
    %v116 = vmax.f32 %v114, %v115
    %v117 = vsub.f32 %v101, %v110
    %v118 = vsub.f32 %v104, %v116
    %v119 = vmul.f32 %v117, 1.442695
    %v120 = vpow.pop %v119
    %v121 = vmul.f32 %v118, 1.442695
    %v122 = vpow.pop %v121
    %v123 = vrot.slane %v120, 4
    %v124 = vadd.f32 %v120, %v123
    %v125 = vrot.slane %v124, 2
    %v126 = vadd.f32 %v124, %v125
    %v127 = vrot.slane %v126, 1
    %v128 = vadd.f32 %v126, %v127
    %v129 = vrot.slane %v122, 4
    %v130 = vadd.f32 %v122, %v129
    %v131 = vrot.slane %v130, 2
    %v132 = vadd.f32 %v130, %v131
    %v133 = vrot.slane %v132, 1
    %v134 = vadd.f32 %v132, %v133
    %v135 = vrcp.pop %v128
    %v136 = vmul.f32 %v128, %v135
    %v137 = vsub.f32 1.0, %v136
    %v138 = vmul.f32 %v135, %v137
    %v139 = vadd.f32 %v135, %v138
    %vm140 = vweird.f32 %v128
    %vm141 = vweird.f32 %v135
    %vm142 = vmor %vm140, %vm141
    %v143 = vsel %vm142, %v135, %v139
    %v144 = vand.u32 2147483647, %v128
    %vm145 = vcmp.eq.f32.partialorder %v144, 8.507059e+37
    %v146 = vand.u32 %v128, 2147483648
    %v147 = vor.u32 1.1754944e-38, %v146
    %v148 = vsel %vm145, %v147, %v143
    %v149 = vmul.f32 %v120, %v148
    %v150 = vrcp.pop %v134
    %v151 = vmul.f32 %v134, %v150
    %v152 = vsub.f32 1.0, %v151
    %v153 = vmul.f32 %v150, %v152
    %v154 = vadd.f32 %v150, %v153
    %vm155 = vweird.f32 %v134
    %vm156 = vweird.f32 %v150
    %vm157 = vmor %vm155, %vm156
    %v158 = vsel %vm157, %v150, %v154
    %v159 = vand.u32 2147483647, %v134
    %vm160 = vcmp.eq.f32.partialorder %v159, 8.507059e+37
    %v161 = vand.u32 %v134, 2147483648
    %v162 = vor.u32 1.1754944e-38, %v161
    %v163 = vsel %vm160, %v162, %v158
    %v164 = vmul.f32 %v122, %v163
    %v165 = vmul.f32 %v50, %v149
    %v166 = vmul.f32 %v51, %v164
    %v167 = vsel %vm60, %v165, 0.0
    %v168 = vrot.slane %v167, 4
    %v169 = vadd.f32 %v167, %v168
    %v170 = vrot.slane %v169, 2
    %v171 = vadd.f32 %v169, %v170
    %v172 = vrot.slane %v171, 1
    %v173 = vadd.f32 %v171, %v172
    %v174 = vsel %vm60, %v166, 0.0
    %v175 = vrot.slane %v174, 4
    %v176 = vadd.f32 %v174, %v175
    %v177 = vrot.slane %v176, 2
    %v178 = vadd.f32 %v176, %v177
    %v179 = vrot.slane %v178, 1
    %v180 = vadd.f32 %v178, %v179
    %vm183 = vcmask 1041409
    %v184 = vsel %vm183, %v180, %v173
    %vm186 = vcmask 254976
    %187 = vst.msk [vmem:[#allocation7] sm:$0x3] %vm186, %v184
    // Predicated region
    $region26: #{tpu_custom_call.1} parent=1 // pred_check
      _
    $region27: #{tpu_custom_call.1} parent=1 // pred_check_branch
      %189 = sbr.rel (0) target = $region29
    $region28: #{tpu_custom_call.1} parent=1 // pred_region
      %191 = vsyncadd [#allocation4], 0
      %s193 = sshll.u32 [#allocation7], 4
      %s194 = int_to_ptr.vmem [resolvable:$true] %s193
      %s195 = sshll.u32 %s4, 4
      %s196 = int_to_ptr.hbm [resolvable:$true] %s195
      %198 = dma.vmem_to_hbm [thread:$0]  %s194, 32, %s196, [#allocation4]
    $region29: #{tpu_custom_call.1} parent=1 // pred_fallthru
      _
    // Predicated region
    $region30: #{tpu_custom_call.1} parent=1 // pred_check
      _
    $region31: #{tpu_custom_call.1} parent=1 // pred_check_branch
      %200 = sbr.rel (0) target = $region33
    $region32: #{tpu_custom_call.1} parent=1 // pred_region
      %202 = dma.done [#allocation4], 32
    $region33: #{tpu_custom_call.1} parent=1 // pred_fallthru
      _
    %203 = vsyncpa [#allocation3], 1
    %204 = vsyncpa [#allocation6], 1
    %205 = vsyncpa [#allocation4], 1

</llo_original>
